<compile_context>
chip_gen: v7x
topology: tpu7x:2x2x1
jax: 0.10.0
libtpu: 0.0.40
codegen_flags: <defaults>
</compile_context>

<pallas_src>
import math
import jax
import jax.numpy as jnp
from jax.experimental import pallas as pl
from jax.experimental.pallas import tpu as pltpu


def _window_geometry(H, W, levels):
    """Static per-level window bounds in *unpadded* coordinates.

    Returns [(hk, wk, [(r0, r1, c0, c1, has_pad), ...]), ...] where the
    (r0:r1, c0:c1) slice is the clipped window and has_pad marks windows that
    would include zero padding in the PyTorch formulation.
    """
    geoms = []
    for level in levels:
        hk = int(math.ceil(H / level))
        wk = int(math.ceil(W / level))
        h_pad1 = int(math.floor((hk * level - H) / 2))
        w_pad1 = int(math.floor((wk * level - W) / 2))
        wins = []
        for li in range(level):
            for lj in range(level):
                r0 = li * hk - h_pad1
                r1 = r0 + hk
                c0 = lj * wk - w_pad1
                c1 = c0 + wk
                r0c, r1c = max(r0, 0), min(r1, H)
                c0c, c1c = max(c0, 0), min(c1, W)
                has_pad = (r0 < 0) or (r1 > H) or (c0 < 0) or (c1 > W)
                wins.append((r0c, r1c, c0c, c1c, has_pad))
        geoms.append((hk, wk, wins))
    return geoms


def _make_spp_kernel(geoms, mode):
    """Kernel closure over static level/window geometry.

    x_ref block:   (H, W, bc_tile)     -- channels on the lane axis
    out_ref block: (total, bc_tile)    -- single lane-dense store per step
    """
    def kernel(x_ref, out_ref):
        bc = x_ref.shape[-1]
        row_dtype = jnp.float32 if mode == 'avg' else x_ref.dtype
        rows = []
        for (hk, wk, wins) in geoms:
            inv = 1.0 / float(hk * wk)
            for (r0, r1, c0, c1, has_pad) in wins:
                if r1 <= r0 or c1 <= c0:
                    # Window lies entirely in the zero padding.
                    rows.append(jnp.zeros((1, bc), dtype=row_dtype))
                    continue
                win = x_ref[r0:r1, c0:c1, :]          # (hr, wr, bc)
                if mode == 'max':
                    r = jnp.max(win, axis=0)          # (wr, bc)  major-dim reduce
                    r = jnp.max(r, axis=0, keepdims=True)   # (1, bc) sublane reduce
                    if has_pad:
                        # Zero padding participates in the max only for
                        # windows that actually touch it.
                        r = jnp.maximum(r, 0)
                elif mode == 'avg':
                    w32 = win.astype(jnp.float32)
                    r = jnp.sum(w32, axis=0)
                    # count_include_pad=True -> fixed divisor, as a const mul.
                    r = jnp.sum(r, axis=0, keepdims=True) * inv
                else:
                    raise RuntimeError('Unknown pooling type: %s' % mode)
                rows.append(r)
        out = jnp.concatenate(rows, axis=0)           # (total, bc)
        out_ref[...] = out.astype(out_ref.dtype)
    return kernel


def spatial_pyramid_pool_2d(x, levels, mode='max'):
    """JAX/Pallas equivalent of SpatialPyramidPooling2D.forward (NCHW input).

    Returns (B, C, sum(level*level)) in x.dtype.
    """
    B, C, H, W = x.shape
    BC = B * C
    levels = tuple(int(l) for l in levels)
    total = sum(l * l for l in levels)
    geoms = _window_geometry(H, W, levels)

    # Channels-on-lanes layout: (H, W, BC). One extra transpose pass replaces
    # the former per-level padded copies and makes the kernel output lane-dense.
    xt = jnp.transpose(x.reshape(BC, H, W), (1, 2, 0))

    LANE = 128
    itemsize = jnp.dtype(x.dtype).itemsize
    if BC <= LANE:
        # Tiny channel count: full-extent block (allowed by the layout rules).
        bc_tile = BC
        bc_pad = BC
    else:
        # VMEM budget per grid step (double-buffered input + f32 temps),
        # conservative enough for v7x's smaller scoped VMEM default.
        budget = 8 * 1024 * 1024
        per_bc = 2 * (H * W + total) * max(itemsize, 4)
        cap = max(LANE, min(1024, (budget // per_bc) // LANE * LANE))
        bc_round = pl.cdiv(BC, LANE) * LANE
        bc_tile = min(cap, bc_round)
        # Keep at least 2 grid steps when possible (v7x has 2 TensorCores).
        if bc_round > LANE and bc_round // bc_tile < 2:
            bc_tile = max(LANE, ((bc_round // 2) // LANE) * LANE)
        bc_pad = pl.cdiv(BC, bc_tile) * bc_tile
        if bc_pad != BC:
            xt = jnp.pad(xt, ((0, 0), (0, 0), (0, bc_pad - BC)))

    grid = (bc_pad // bc_tile,)
    kernel = _make_spp_kernel(geoms, mode)

    cost = pl.CostEstimate(
        flops=int(len(levels) * bc_pad * H * W),
        transcendentals=0,
        bytes_accessed=int(bc_pad * H * W * itemsize + bc_pad * total * itemsize),
    )

    out = pl.pallas_call(
        kernel,
        out_shape=jax.ShapeDtypeStruct((total, bc_pad), x.dtype),
        grid=grid,
        in_specs=[pl.BlockSpec((H, W, bc_tile), lambda i: (0, 0, i))],
        out_specs=pl.BlockSpec((total, bc_tile), lambda i: (0, i)),
        compiler_params=pltpu.CompilerParams(
            dimension_semantics=("parallel",)),
        cost_estimate=cost,
    )(xt)

    out = out[:, :BC]                                  # drop channel padding
    return jnp.transpose(out, (1, 0)).reshape(B, C, total)


def spp_reference(x, levels, mode='max'):
    """Pure-JAX reference reproducing the PyTorch module semantics."""
    B, C, H, W = x.shape
    outs = []
    for level in levels:
        hk = int(math.ceil(H / level))
        wk = int(math.ceil(W / level))
        w_pad1 = int(math.floor((wk * level - W) / 2))
        w_pad2 = int(math.ceil((wk * level - W) / 2))
        h_pad1 = int(math.floor((hk * level - H) / 2))
        h_pad2 = int(math.ceil((hk * level - H) / 2))
        xp = jnp.pad(x, ((0, 0), (0, 0), (h_pad1, h_pad2), (w_pad1, w_pad2)))
        xp = xp.reshape(B, C, level, hk, level, wk)
        if mode == 'max':
            r = jnp.max(xp, axis=(3, 5))
        else:
            r = jnp.mean(xp, axis=(3, 5))  # count_include_pad=True
        outs.append(r.reshape(B, C, level * level))
    return jnp.concatenate(outs, axis=-1)


if __name__ == "__main__":
    key = jax.random.PRNGKey(0)
    k1, k2 = jax.random.split(key)
    levels = [1, 2, 3]
    ok = True

    # Case 1: PyTorch-style NCHW input (batch=2, channels=4, spatial=16x16).
    x1 = jax.random.normal(k1, (2, 4, 16, 16), dtype=jnp.float32)
    # Case 2: BC > 128 exercises the channel-padding / multi-step grid path;
    # odd H exercises the in-kernel zero-pad window handling (level 2 and 3).
    x2 = jax.random.normal(k2, (2, 96, 13, 16), dtype=jnp.float32)

    expected_n = sum(l * l for l in levels)
    for x in (x1, x2):
        B, C, H, W = x.shape
        for mode in ('max', 'avg'):
            out = jax.block_until_ready(
                spatial_pyramid_pool_2d(x, levels, mode=mode))
            ref = spp_reference(x, levels, mode=mode)
            assert out.shape == (B, C, expected_n), out.shape
            assert out.dtype == x.dtype
            if not jnp.allclose(out, ref, atol=1e-5, rtol=1e-5):
                ok = False

    if ok:
        print("KERNEL_OK")
</pallas_src>

<mosaic_0001>
module attributes {stable_mosaic.version = 11 : i64} {
  func.func @kernel(%arg0: i32, %arg1: memref<16x16x8xf32, #tpu.memory_space<vmem>>, %arg2: memref<14x8xf32, #tpu.memory_space<vmem>>) attributes {dimension_semantics = [#tpu.dimension_semantics<parallel>], iteration_bounds = array<i64: 1>, scalar_prefetch = 0 : i64, scratch_operands = 0 : i64, tpu.core_type = #tpu.core_type<tc>, window_params = [{transform_indices = @transform_0, window_bounds = array<i64: 16, 16, 8>}, {transform_indices = @transform_1, window_bounds = array<i64: 14, 8>}]} {
    %c0 = arith.constant 0 : index
    %c0_0 = arith.constant 0 : index
    %c0_1 = arith.constant 0 : index
    %0 = vector.load %arg1[%c0, %c0_0, %c0_1] : memref<16x16x8xf32, #tpu.memory_space<vmem>>, vector<16x16x8xf32>
    %cst = arith.constant dense<0xFF800000> : vector<16x8xf32>
    %1 = vector.multi_reduction <maximumf>, %0, %cst [0] : vector<16x16x8xf32> to vector<16x8xf32>
    %cst_2 = arith.constant dense<0xFF800000> : vector<8xf32>
    %2 = vector.multi_reduction <maximumf>, %1, %cst_2 [0] : vector<16x8xf32> to vector<8xf32>
    %3 = vector.shape_cast %2 : vector<8xf32> to vector<1x8xf32>
    %c0_3 = arith.constant 0 : index
    %c0_4 = arith.constant 0 : index
    %c0_5 = arith.constant 0 : index
    %4 = vector.load %arg1[%c0_3, %c0_4, %c0_5] : memref<16x16x8xf32, #tpu.memory_space<vmem>>, vector<8x8x8xf32>
    %cst_6 = arith.constant dense<0xFF800000> : vector<8x8xf32>
    %5 = vector.multi_reduction <maximumf>, %4, %cst_6 [0] : vector<8x8x8xf32> to vector<8x8xf32>
    %cst_7 = arith.constant dense<0xFF800000> : vector<8xf32>
    %6 = vector.multi_reduction <maximumf>, %5, %cst_7 [0] : vector<8x8xf32> to vector<8xf32>
    %7 = vector.shape_cast %6 : vector<8xf32> to vector<1x8xf32>
    %c0_8 = arith.constant 0 : index
    %c8 = arith.constant 8 : index
    %c0_9 = arith.constant 0 : index
    %8 = vector.load %arg1[%c0_8, %c8, %c0_9] : memref<16x16x8xf32, #tpu.memory_space<vmem>>, vector<8x8x8xf32>
    %cst_10 = arith.constant dense<0xFF800000> : vector<8x8xf32>
    %9 = vector.multi_reduction <maximumf>, %8, %cst_10 [0] : vector<8x8x8xf32> to vector<8x8xf32>
    %cst_11 = arith.constant dense<0xFF800000> : vector<8xf32>
    %10 = vector.multi_reduction <maximumf>, %9, %cst_11 [0] : vector<8x8xf32> to vector<8xf32>
    %11 = vector.shape_cast %10 : vector<8xf32> to vector<1x8xf32>
    %c8_12 = arith.constant 8 : index
    %c0_13 = arith.constant 0 : index
    %c0_14 = arith.constant 0 : index
    %12 = vector.load %arg1[%c8_12, %c0_13, %c0_14] : memref<16x16x8xf32, #tpu.memory_space<vmem>>, vector<8x8x8xf32>
    %cst_15 = arith.constant dense<0xFF800000> : vector<8x8xf32>
    %13 = vector.multi_reduction <maximumf>, %12, %cst_15 [0] : vector<8x8x8xf32> to vector<8x8xf32>
    %cst_16 = arith.constant dense<0xFF800000> : vector<8xf32>
    %14 = vector.multi_reduction <maximumf>, %13, %cst_16 [0] : vector<8x8xf32> to vector<8xf32>
    %15 = vector.shape_cast %14 : vector<8xf32> to vector<1x8xf32>
    %c8_17 = arith.constant 8 : index
    %c8_18 = arith.constant 8 : index
    %c0_19 = arith.constant 0 : index
    %16 = vector.load %arg1[%c8_17, %c8_18, %c0_19] : memref<16x16x8xf32, #tpu.memory_space<vmem>>, vector<8x8x8xf32>
    %cst_20 = arith.constant dense<0xFF800000> : vector<8x8xf32>
    %17 = vector.multi_reduction <maximumf>, %16, %cst_20 [0] : vector<8x8x8xf32> to vector<8x8xf32>
    %cst_21 = arith.constant dense<0xFF800000> : vector<8xf32>
    %18 = vector.multi_reduction <maximumf>, %17, %cst_21 [0] : vector<8x8xf32> to vector<8xf32>
    %19 = vector.shape_cast %18 : vector<8xf32> to vector<1x8xf32>
    %c0_22 = arith.constant 0 : index
    %c0_23 = arith.constant 0 : index
    %c0_24 = arith.constant 0 : index
    %20 = vector.load %arg1[%c0_22, %c0_23, %c0_24] : memref<16x16x8xf32, #tpu.memory_space<vmem>>, vector<5x5x8xf32>
    %cst_25 = arith.constant dense<0xFF800000> : vector<5x8xf32>
    %21 = vector.multi_reduction <maximumf>, %20, %cst_25 [0] : vector<5x5x8xf32> to vector<5x8xf32>
    %cst_26 = arith.constant dense<0xFF800000> : vector<8xf32>
    %22 = vector.multi_reduction <maximumf>, %21, %cst_26 [0] : vector<5x8xf32> to vector<8xf32>
    %23 = vector.shape_cast %22 : vector<8xf32> to vector<1x8xf32>
    %cst_27 = arith.constant 0.000000e+00 : f32
    %24 = vector.broadcast %cst_27 : f32 to vector<1x8xf32>
    %25 = arith.maximumf %23, %24 : vector<1x8xf32>
    %c0_28 = arith.constant 0 : index
    %c5 = arith.constant 5 : index
    %c0_29 = arith.constant 0 : index
    %26 = vector.load %arg1[%c0_28, %c5, %c0_29] : memref<16x16x8xf32, #tpu.memory_space<vmem>>, vector<5x6x8xf32>
    %cst_30 = arith.constant dense<0xFF800000> : vector<6x8xf32>
    %27 = vector.multi_reduction <maximumf>, %26, %cst_30 [0] : vector<5x6x8xf32> to vector<6x8xf32>
    %cst_31 = arith.constant dense<0xFF800000> : vector<8xf32>
    %28 = vector.multi_reduction <maximumf>, %27, %cst_31 [0] : vector<6x8xf32> to vector<8xf32>
    %29 = vector.shape_cast %28 : vector<8xf32> to vector<1x8xf32>
    %cst_32 = arith.constant 0.000000e+00 : f32
    %30 = vector.broadcast %cst_32 : f32 to vector<1x8xf32>
    %31 = arith.maximumf %29, %30 : vector<1x8xf32>
    %c0_33 = arith.constant 0 : index
    %c11 = arith.constant 11 : index
    %c0_34 = arith.constant 0 : index
    %32 = vector.load %arg1[%c0_33, %c11, %c0_34] : memref<16x16x8xf32, #tpu.memory_space<vmem>>, vector<5x5x8xf32>
    %cst_35 = arith.constant dense<0xFF800000> : vector<5x8xf32>
    %33 = vector.multi_reduction <maximumf>, %32, %cst_35 [0] : vector<5x5x8xf32> to vector<5x8xf32>
    %cst_36 = arith.constant dense<0xFF800000> : vector<8xf32>
    %34 = vector.multi_reduction <maximumf>, %33, %cst_36 [0] : vector<5x8xf32> to vector<8xf32>
    %35 = vector.shape_cast %34 : vector<8xf32> to vector<1x8xf32>
    %cst_37 = arith.constant 0.000000e+00 : f32
    %36 = vector.broadcast %cst_37 : f32 to vector<1x8xf32>
    %37 = arith.maximumf %35, %36 : vector<1x8xf32>
    %c5_38 = arith.constant 5 : index
    %c0_39 = arith.constant 0 : index
    %c0_40 = arith.constant 0 : index
    %38 = vector.load %arg1[%c5_38, %c0_39, %c0_40] : memref<16x16x8xf32, #tpu.memory_space<vmem>>, vector<6x5x8xf32>
    %cst_41 = arith.constant dense<0xFF800000> : vector<5x8xf32>
    %39 = vector.multi_reduction <maximumf>, %38, %cst_41 [0] : vector<6x5x8xf32> to vector<5x8xf32>
    %cst_42 = arith.constant dense<0xFF800000> : vector<8xf32>
    %40 = vector.multi_reduction <maximumf>, %39, %cst_42 [0] : vector<5x8xf32> to vector<8xf32>
    %41 = vector.shape_cast %40 : vector<8xf32> to vector<1x8xf32>
    %cst_43 = arith.constant 0.000000e+00 : f32
    %42 = vector.broadcast %cst_43 : f32 to vector<1x8xf32>
    %43 = arith.maximumf %41, %42 : vector<1x8xf32>
    %c5_44 = arith.constant 5 : index
    %c5_45 = arith.constant 5 : index
    %c0_46 = arith.constant 0 : index
    %44 = vector.load %arg1[%c5_44, %c5_45, %c0_46] : memref<16x16x8xf32, #tpu.memory_space<vmem>>, vector<6x6x8xf32>
    %cst_47 = arith.constant dense<0xFF800000> : vector<6x8xf32>
    %45 = vector.multi_reduction <maximumf>, %44, %cst_47 [0] : vector<6x6x8xf32> to vector<6x8xf32>
    %cst_48 = arith.constant dense<0xFF800000> : vector<8xf32>
    %46 = vector.multi_reduction <maximumf>, %45, %cst_48 [0] : vector<6x8xf32> to vector<8xf32>
    %47 = vector.shape_cast %46 : vector<8xf32> to vector<1x8xf32>
    %c5_49 = arith.constant 5 : index
    %c11_50 = arith.constant 11 : index
    %c0_51 = arith.constant 0 : index
    %48 = vector.load %arg1[%c5_49, %c11_50, %c0_51] : memref<16x16x8xf32, #tpu.memory_space<vmem>>, vector<6x5x8xf32>
    %cst_52 = arith.constant dense<0xFF800000> : vector<5x8xf32>
    %49 = vector.multi_reduction <maximumf>, %48, %cst_52 [0] : vector<6x5x8xf32> to vector<5x8xf32>
    %cst_53 = arith.constant dense<0xFF800000> : vector<8xf32>
    %50 = vector.multi_reduction <maximumf>, %49, %cst_53 [0] : vector<5x8xf32> to vector<8xf32>
    %51 = vector.shape_cast %50 : vector<8xf32> to vector<1x8xf32>
    %cst_54 = arith.constant 0.000000e+00 : f32
    %52 = vector.broadcast %cst_54 : f32 to vector<1x8xf32>
    %53 = arith.maximumf %51, %52 : vector<1x8xf32>
    %c11_55 = arith.constant 11 : index
    %c0_56 = arith.constant 0 : index
    %c0_57 = arith.constant 0 : index
    %54 = vector.load %arg1[%c11_55, %c0_56, %c0_57] : memref<16x16x8xf32, #tpu.memory_space<vmem>>, vector<5x5x8xf32>
    %cst_58 = arith.constant dense<0xFF800000> : vector<5x8xf32>
    %55 = vector.multi_reduction <maximumf>, %54, %cst_58 [0] : vector<5x5x8xf32> to vector<5x8xf32>
    %cst_59 = arith.constant dense<0xFF800000> : vector<8xf32>
    %56 = vector.multi_reduction <maximumf>, %55, %cst_59 [0] : vector<5x8xf32> to vector<8xf32>
    %57 = vector.shape_cast %56 : vector<8xf32> to vector<1x8xf32>
    %cst_60 = arith.constant 0.000000e+00 : f32
    %58 = vector.broadcast %cst_60 : f32 to vector<1x8xf32>
    %59 = arith.maximumf %57, %58 : vector<1x8xf32>
    %c11_61 = arith.constant 11 : index
    %c5_62 = arith.constant 5 : index
    %c0_63 = arith.constant 0 : index
    %60 = vector.load %arg1[%c11_61, %c5_62, %c0_63] : memref<16x16x8xf32, #tpu.memory_space<vmem>>, vector<5x6x8xf32>
    %cst_64 = arith.constant dense<0xFF800000> : vector<6x8xf32>
    %61 = vector.multi_reduction <maximumf>, %60, %cst_64 [0] : vector<5x6x8xf32> to vector<6x8xf32>
    %cst_65 = arith.constant dense<0xFF800000> : vector<8xf32>
    %62 = vector.multi_reduction <maximumf>, %61, %cst_65 [0] : vector<6x8xf32> to vector<8xf32>
    %63 = vector.shape_cast %62 : vector<8xf32> to vector<1x8xf32>
    %cst_66 = arith.constant 0.000000e+00 : f32
    %64 = vector.broadcast %cst_66 : f32 to vector<1x8xf32>
    %65 = arith.maximumf %63, %64 : vector<1x8xf32>
    %c11_67 = arith.constant 11 : index
    %c11_68 = arith.constant 11 : index
    %c0_69 = arith.constant 0 : index
    %66 = vector.load %arg1[%c11_67, %c11_68, %c0_69] : memref<16x16x8xf32, #tpu.memory_space<vmem>>, vector<5x5x8xf32>
    %cst_70 = arith.constant dense<0xFF800000> : vector<5x8xf32>
    %67 = vector.multi_reduction <maximumf>, %66, %cst_70 [0] : vector<5x5x8xf32> to vector<5x8xf32>
    %cst_71 = arith.constant dense<0xFF800000> : vector<8xf32>
    %68 = vector.multi_reduction <maximumf>, %67, %cst_71 [0] : vector<5x8xf32> to vector<8xf32>
    %69 = vector.shape_cast %68 : vector<8xf32> to vector<1x8xf32>
    %cst_72 = arith.constant 0.000000e+00 : f32
    %70 = vector.broadcast %cst_72 : f32 to vector<1x8xf32>
    %71 = arith.maximumf %69, %70 : vector<1x8xf32>
    %72 = tpu.concatenate %3, %7, %11, %15, %19, %25, %31, %37, %43, %47, %53, %59, %65, %71 in 0 : vector<1x8xf32>, vector<1x8xf32>, vector<1x8xf32>, vector<1x8xf32>, vector<1x8xf32>, vector<1x8xf32>, vector<1x8xf32>, vector<1x8xf32>, vector<1x8xf32>, vector<1x8xf32>, vector<1x8xf32>, vector<1x8xf32>, vector<1x8xf32>, vector<1x8xf32> -> vector<14x8xf32>
    %c0_73 = arith.constant 0 : index
    %c0_74 = arith.constant 0 : index
    %73 = vector.load %arg2[%c0_73, %c0_74] : memref<14x8xf32, #tpu.memory_space<vmem>>, vector<14x8xf32>
    tpu.vector_store %arg2[%c0_73, %c0_74], %72 {strides = array<i32>} : memref<14x8xf32, #tpu.memory_space<vmem>>, vector<14x8xf32>,
    return
  }
  func.func @transform_0(%arg0: i32) -> (i32, i32, i32) {
    %c0_i32 = arith.constant 0 : i32
    %c0_i32_0 = arith.constant 0 : i32
    %c0_i32_1 = arith.constant 0 : i32
    return %c0_i32, %c0_i32_0, %arg0 : i32, i32, i32
  }
  func.func @transform_1(%arg0: i32) -> (i32, i32) {
    %c0_i32 = arith.constant 0 : i32
    %c0_i32_0 = arith.constant 0 : i32
    return %c0_i32, %arg0 : i32, i32
  }
}

</mosaic_0001>

<llo_original>
// kernel: tpu_custom_call.1
$region0: #{tpu_custom_call.1}
  #allocation0 [shape = 'u32[]', space=smem, size = 0x4, offset = 0x4, fixed_abs, tag = 'smem constant byte address 0x4 - core index']
  #allocation1 [shape = 'u32[144,128]{1,0:T(1,128)}', space=vmem, size = 0x12000, scoped, tag = 'internal scratch']
  %s0 = inlined_call_operand.vmem [shape: f32[16,16,8], index: 0, kind: input, shape index: {}]
  %s1 = inlined_call_operand.vmem [shape: f32[14,8], index: 1, kind: output, shape index: {}]
  %s2 = sld [smem:[#allocation0]]
  $region14: #{tpu_custom_call.1} parent=0
    _
  %s4 = ssub.s32 1, %s2
  %s5 = scalar_select 0, %s4, %s2
  // Predicated region
  $region2: #{tpu_custom_call.1} parent=0 // pred_check
    _
  $region3: #{tpu_custom_call.1} parent=0 // pred_check_branch
    %7 = sbr.rel (0) target = $region5
  $region4: #{tpu_custom_call.1} parent=0 // pred_region
    _
  $region5: #{tpu_custom_call.1} parent=0 // pred_fallthru
    _
  %v8 = vld [vmem:[%s0] sm:$0xff]
  %v9 = vld [vmem:[%s0 + $0x8] sm:$0xff]
  %v10 = vld [vmem:[%s0 + $0x10] sm:$0xff]
  %v11 = vld [vmem:[%s0 + $0x18] sm:$0xff]
  %v12 = vld [vmem:[%s0 + $0x20] sm:$0xff]
  %v13 = vld [vmem:[%s0 + $0x28] sm:$0xff]
  %v14 = vld [vmem:[%s0 + $0x30] sm:$0xff]
  %v15 = vld [vmem:[%s0 + $0x38] sm:$0xff]
  %v16 = vld [vmem:[%s0 + $0x40] sm:$0xff]
  %v17 = vld [vmem:[%s0 + $0x48] sm:$0xff]
  %v18 = vld [vmem:[%s0 + $0x50] sm:$0xff]
  %v19 = vld [vmem:[%s0 + $0x58] sm:$0xff]
  %v20 = vld [vmem:[%s0 + $0x60] sm:$0xff]
  %v21 = vld [vmem:[%s0 + $0x68] sm:$0xff]
  %v22 = vld [vmem:[%s0 + $0x70] sm:$0xff]
  %v23 = vld [vmem:[%s0 + $0x78] sm:$0xff]
  %v24 = vld [vmem:[%s0 + $0x80] sm:$0xff]
  %v25 = vld [vmem:[%s0 + $0x88] sm:$0xff]
  %v26 = vld [vmem:[%s0 + $0x90] sm:$0xff]
  %v27 = vld [vmem:[%s0 + $0x98] sm:$0xff]
  %v28 = vld [vmem:[%s0 + $0xa0] sm:$0xff]
  %v29 = vld [vmem:[%s0 + $0xa8] sm:$0xff]
  %v30 = vld [vmem:[%s0 + $0xb0] sm:$0xff]
  %v31 = vld [vmem:[%s0 + $0xb8] sm:$0xff]
  %v32 = vld [vmem:[%s0 + $0xc0] sm:$0xff]
  %v33 = vld [vmem:[%s0 + $0xc8] sm:$0xff]
  %v34 = vld [vmem:[%s0 + $0xd0] sm:$0xff]
  %v35 = vld [vmem:[%s0 + $0xd8] sm:$0xff]
  %v36 = vld [vmem:[%s0 + $0xe0] sm:$0xff]
  %v37 = vld [vmem:[%s0 + $0xe8] sm:$0xff]
  %v38 = vld [vmem:[%s0 + $0xf0] sm:$0xff]
  %v39 = vld [vmem:[%s0 + $0xf8] sm:$0xff]
  %vm40 = vcmask 64512
  %v41 = vsel %vm40, %v8, -inf
  %v42 = vsel %vm40, %v10, -inf
  %v43 = vsel %vm40, %v12, -inf
  %v44 = vmax.f32 %v41, %v43
  %v45 = vsel %vm40, %v14, -inf
  %v46 = vmax.f32 %v42, %v45
  %v47 = vsel %vm40, %v16, -inf
  %v48 = vmax.f32 %v44, %v47
  %v49 = vsel %vm40, %v18, -inf
  %v50 = vmax.f32 %v46, %v49
  %v51 = vsel %vm40, %v20, -inf
  %v52 = vmax.f32 %v48, %v51
  %v53 = vsel %vm40, %v22, -inf
  %v54 = vmax.f32 %v50, %v53
  %v55 = vsel %vm40, %v24, -inf
  %v56 = vmax.f32 %v52, %v55
  %v57 = vsel %vm40, %v26, -inf
  %v58 = vmax.f32 %v54, %v57
  %v59 = vsel %vm40, %v28, -inf
  %v60 = vmax.f32 %v56, %v59
  %v61 = vsel %vm40, %v30, -inf
  %v62 = vmax.f32 %v58, %v61
  %v63 = vsel %vm40, %v32, -inf
  %v64 = vmax.f32 %v60, %v63
  %v65 = vsel %vm40, %v34, -inf
  %v66 = vmax.f32 %v62, %v65
  %v67 = vsel %vm40, %v36, -inf
  %v68 = vmax.f32 %v64, %v67
  %v69 = vsel %vm40, %v38, -inf
  %v70 = vmax.f32 %v66, %v69
  %v71 = vmax.f32 %v68, %v70
  %v72 = vsel %vm40, %v9, -inf
  %v73 = vsel %vm40, %v11, -inf
  %v74 = vsel %vm40, %v13, -inf
  %v75 = vmax.f32 %v72, %v74
  %v76 = vsel %vm40, %v15, -inf
  %v77 = vmax.f32 %v73, %v76
  %v78 = vsel %vm40, %v17, -inf
  %v79 = vmax.f32 %v75, %v78
  %v80 = vsel %vm40, %v19, -inf
  %v81 = vmax.f32 %v77, %v80
  %v82 = vsel %vm40, %v21, -inf
  %v83 = vmax.f32 %v79, %v82
  %v84 = vsel %vm40, %v23, -inf
  %v85 = vmax.f32 %v81, %v84
  %v86 = vsel %vm40, %v25, -inf
  %v87 = vmax.f32 %v83, %v86
  %v88 = vsel %vm40, %v27, -inf
  %v89 = vmax.f32 %v85, %v88
  %v90 = vsel %vm40, %v29, -inf
  %v91 = vmax.f32 %v87, %v90
  %v92 = vsel %vm40, %v31, -inf
  %v93 = vmax.f32 %v89, %v92
  %v94 = vsel %vm40, %v33, -inf
  %v95 = vmax.f32 %v91, %v94
  %v96 = vsel %vm40, %v35, -inf
  %v97 = vmax.f32 %v93, %v96
  %v98 = vsel %vm40, %v37, -inf
  %v99 = vmax.f32 %v95, %v98
  %v100 = vsel %vm40, %v39, -inf
  %v101 = vmax.f32 %v97, %v100
  %v102 = vmax.f32 %v99, %v101
  %v103 = vsel %vm40, %v71, -inf
  %v104 = vsel %vm40, %v102, -inf
  %v105 = vmax.f32 %v103, %v104
  %v106 = vrot.slane %v105, 4
  %v107 = vmax.f32 %v105, %v106
  %v108 = vrot.slane %v107, 2
  %v109 = vmax.f32 %v107, %v108
  %v110 = vrot.slane %v109, 1
  %v111 = vmax.f32 %v109, %v110
  %v112 = vmax.f32 %v41, %v47
  %v113 = vmax.f32 %v42, %v49
  %v114 = vmax.f32 %v43, %v51
  %v115 = vmax.f32 %v45, %v53
  %v116 = vmax.f32 %v112, %v113
  %v117 = vmax.f32 %v114, %v115
  %v118 = vmax.f32 %v116, %v117
  %v119 = vsel %vm40, %v118, -inf
  %v120 = vrot.slane %v119, 4
  %v121 = vmax.f32 %v119, %v120
  %v122 = vrot.slane %v121, 2
  %v123 = vmax.f32 %v121, %v122
  %v124 = vrot.slane %v123, 1
  %v125 = vmax.f32 %v123, %v124
  %v126 = vmax.f32 %v72, %v78
  %v127 = vmax.f32 %v73, %v80
  %v128 = vmax.f32 %v74, %v82
  %v129 = vmax.f32 %v76, %v84
  %v130 = vmax.f32 %v126, %v127
  %v131 = vmax.f32 %v128, %v129
  %v132 = vmax.f32 %v130, %v131
  %v133 = vsel %vm40, %v132, -inf
  %v134 = vrot.slane %v133, 4
  %v135 = vmax.f32 %v133, %v134
  %v136 = vrot.slane %v135, 2
  %v137 = vmax.f32 %v135, %v136
  %v138 = vrot.slane %v137, 1
  %v139 = vmax.f32 %v137, %v138
  %s140 = scalar_lea.vmem %s0, 128
  %v141 = vld [vmem:[%s140] sm:$0xff]
  %v142 = vld [vmem:[%s140 + $0x10] sm:$0xff]
  %v143 = vld [vmem:[%s140 + $0x20] sm:$0xff]
  %v144 = vld [vmem:[%s140 + $0x30] sm:$0xff]
  %v145 = vld [vmem:[%s140 + $0x40] sm:$0xff]
  %v146 = vld [vmem:[%s140 + $0x50] sm:$0xff]
  %v147 = vld [vmem:[%s140 + $0x60] sm:$0xff]
  %v148 = vld [vmem:[%s140 + $0x70] sm:$0xff]
  %v149 = vsel %vm40, %v141, -inf
  %v150 = vsel %vm40, %v142, -inf
  %v151 = vsel %vm40, %v143, -inf
  %v152 = vsel %vm40, %v144, -inf
  %v153 = vsel %vm40, %v145, -inf
  %v154 = vmax.f32 %v149, %v153
  %v155 = vsel %vm40, %v146, -inf
  %v156 = vmax.f32 %v150, %v155
  %v157 = vsel %vm40, %v147, -inf
  %v158 = vmax.f32 %v151, %v157
  %v159 = vsel %vm40, %v148, -inf
  %v160 = vmax.f32 %v152, %v159
  %v161 = vmax.f32 %v154, %v156
  %v162 = vmax.f32 %v158, %v160
  %v163 = vmax.f32 %v161, %v162
  %v164 = vsel %vm40, %v163, -inf
  %v165 = vrot.slane %v164, 4
  %v166 = vmax.f32 %v164, %v165
  %v167 = vrot.slane %v166, 2
  %v168 = vmax.f32 %v166, %v167
  %v169 = vrot.slane %v168, 1
  %v170 = vmax.f32 %v168, %v169
  %v171 = vld [vmem:[%s140 + $0x8] sm:$0xff]
  %v172 = vld [vmem:[%s140 + $0x18] sm:$0xff]
  %v173 = vld [vmem:[%s140 + $0x28] sm:$0xff]
  %v174 = vld [vmem:[%s140 + $0x38] sm:$0xff]
  %v175 = vld [vmem:[%s140 + $0x48] sm:$0xff]
  %v176 = vld [vmem:[%s140 + $0x58] sm:$0xff]
  %v177 = vld [vmem:[%s140 + $0x68] sm:$0xff]
  %v178 = vld [vmem:[%s140 + $0x78] sm:$0xff]
  %v179 = vsel %vm40, %v171, -inf
  %v180 = vsel %vm40, %v172, -inf
  %v181 = vsel %vm40, %v173, -inf
  %v182 = vsel %vm40, %v174, -inf
  %v183 = vsel %vm40, %v175, -inf
  %v184 = vmax.f32 %v179, %v183
  %v185 = vsel %vm40, %v176, -inf
  %v186 = vmax.f32 %v180, %v185
  %v187 = vsel %vm40, %v177, -inf
  %v188 = vmax.f32 %v181, %v187
  %v189 = vsel %vm40, %v178, -inf
  %v190 = vmax.f32 %v182, %v189
  %v191 = vmax.f32 %v184, %v186
  %v192 = vmax.f32 %v188, %v190
  %v193 = vmax.f32 %v191, %v192
  %v194 = vsel %vm40, %v193, -inf
  %v195 = vrot.slane %v194, 4
  %v196 = vmax.f32 %v194, %v195
  %v197 = vrot.slane %v196, 2
  %v198 = vmax.f32 %v196, %v197
  %v199 = vrot.slane %v198, 1
  %v200 = vmax.f32 %v198, %v199
  %v201 = vld [vmem:[%s0] sm:$0x1f]
  %v202 = vld [vmem:[%s0 + $0x10] sm:$0x1f]
  %v203 = vld [vmem:[%s0 + $0x20] sm:$0x1f]
  %v204 = vld [vmem:[%s0 + $0x30] sm:$0x1f]
  %v205 = vld [vmem:[%s0 + $0x40] sm:$0x1f]
  %vm206 = vcmask 61440
  %v207 = vsel %vm206, %v201, -inf
  %v208 = vsel %vm206, %v202, -inf
  %v209 = vsel %vm206, %v203, -inf
  %v210 = vsel %vm206, %v204, -inf
  %v211 = vsel %vm206, %v205, -inf
  %v212 = vmax.f32 %v207, %v211
  %v213 = vmax.f32 %v212, %v208
  %v214 = vmax.f32 %v209, %v210
  %v215 = vmax.f32 %v213, %v214
  %v216 = vsel %vm206, %v215, -inf
  %v217 = vrot.slane %v216, 4
  %v218 = vmax.f32 %v216, %v217
  %v219 = vrot.slane %v218, 2
  %v220 = vmax.f32 %v218, %v219
  %v221 = vrot.slane %v220, 1
  %v222 = vmax.f32 %v220, %v221
  %v223 = vmax.f32 %v222, 0.0
  %v224 = vld [vmem:[%s0 + $0x5] sm:$0x3f]
  %v225 = vld [vmem:[%s0 + $0x15] sm:$0x3f]
  %v226 = vld [vmem:[%s0 + $0x25] sm:$0x3f]
  %v227 = vld [vmem:[%s0 + $0x35] sm:$0x3f]
  %v228 = vld [vmem:[%s0 + $0x45] sm:$0x3f]
  %vm229 = vcmask 62464
  %v230 = vsel %vm229, %v224, -inf
  %v231 = vsel %vm229, %v225, -inf
  %v232 = vsel %vm229, %v226, -inf
  %v233 = vsel %vm229, %v227, -inf
  %v234 = vsel %vm229, %v228, -inf
  %v235 = vmax.f32 %v230, %v234
  %v236 = vmax.f32 %v235, %v231
  %v237 = vmax.f32 %v232, %v233
  %v238 = vmax.f32 %v236, %v237
  %v239 = vsel %vm229, %v238, -inf
  %v240 = vrot.slane %v239, 4
  %v241 = vmax.f32 %v239, %v240
  %v242 = vrot.slane %v241, 2
  %v243 = vmax.f32 %v241, %v242
  %v244 = vrot.slane %v243, 1
  %v245 = vmax.f32 %v243, %v244
  %v246 = vmax.f32 %v245, 0.0
  %v247 = vld [vmem:[%s0 + $0xb] sm:$0x1f]
  %v248 = vld [vmem:[%s0 + $0x1b] sm:$0x1f]
  %v249 = vld [vmem:[%s0 + $0x2b] sm:$0x1f]
  %v250 = vld [vmem:[%s0 + $0x3b] sm:$0x1f]
  %v251 = vld [vmem:[%s0 + $0x4b] sm:$0x1f]
  %v252 = vsel %vm206, %v247, -inf
  %v253 = vsel %vm206, %v248, -inf
  %v254 = vsel %vm206, %v249, -inf
  %v255 = vsel %vm206, %v250, -inf
  %v256 = vsel %vm206, %v251, -inf
  %v257 = vmax.f32 %v252, %v256
  %v258 = vmax.f32 %v257, %v253
  %v259 = vmax.f32 %v254, %v255
  %v260 = vmax.f32 %v258, %v259
  %v261 = vsel %vm206, %v260, -inf
  %v262 = vrot.slane %v261, 4
  %v263 = vmax.f32 %v261, %v262
  %v264 = vrot.slane %v263, 2
  %v265 = vmax.f32 %v263, %v264
  %v266 = vrot.slane %v265, 1
  %v267 = vmax.f32 %v265, %v266
  %v268 = vmax.f32 %v267, 0.0
  %s269 = scalar_lea.vmem %s0, 80
  %v270 = vld [vmem:[%s269] sm:$0x1f]
  %v271 = vld [vmem:[%s269 + $0x10] sm:$0x1f]
  %v272 = vld [vmem:[%s269 + $0x20] sm:$0x1f]
  %v273 = vld [vmem:[%s269 + $0x30] sm:$0x1f]
  %v274 = vld [vmem:[%s269 + $0x40] sm:$0x1f]
  %v275 = vld [vmem:[%s269 + $0x50] sm:$0x1f]
  %v276 = vsel %vm206, %v270, -inf
  %v277 = vsel %vm206, %v271, -inf
  %v278 = vsel %vm206, %v272, -inf
  %v279 = vsel %vm206, %v273, -inf
  %v280 = vsel %vm206, %v274, -inf
  %v281 = vmax.f32 %v276, %v280
  %v282 = vsel %vm206, %v275, -inf
  %v283 = vmax.f32 %v277, %v282
  %v284 = vmax.f32 %v281, %v283
  %v285 = vmax.f32 %v278, %v279
  %v286 = vmax.f32 %v284, %v285
  %v287 = vsel %vm206, %v286, -inf
  %v288 = vrot.slane %v287, 4
  %v289 = vmax.f32 %v287, %v288
  %v290 = vrot.slane %v289, 2
  %v291 = vmax.f32 %v289, %v290
  %v292 = vrot.slane %v291, 1
  %v293 = vmax.f32 %v291, %v292
  %v294 = vmax.f32 %v293, 0.0
  %v295 = vld [vmem:[%s269 + $0x5] sm:$0x3f]
  %v296 = vld [vmem:[%s269 + $0x15] sm:$0x3f]
  %v297 = vld [vmem:[%s269 + $0x25] sm:$0x3f]
  %v298 = vld [vmem:[%s269 + $0x35] sm:$0x3f]
  %v299 = vld [vmem:[%s269 + $0x45] sm:$0x3f]
  %v300 = vld [vmem:[%s269 + $0x55] sm:$0x3f]
  %v301 = vsel %vm229, %v295, -inf
  %v302 = vsel %vm229, %v296, -inf
  %v303 = vsel %vm229, %v297, -inf
  %v304 = vsel %vm229, %v298, -inf
  %v305 = vsel %vm229, %v299, -inf
  %v306 = vmax.f32 %v301, %v305
  %v307 = vsel %vm229, %v300, -inf
  %v308 = vmax.f32 %v302, %v307
  %v309 = vmax.f32 %v306, %v308
  %v310 = vmax.f32 %v303, %v304
  %v311 = vmax.f32 %v309, %v310
  %v312 = vsel %vm229, %v311, -inf
  %v313 = vrot.slane %v312, 4
  %v314 = vmax.f32 %v312, %v313
  %v315 = vrot.slane %v314, 2
  %v316 = vmax.f32 %v314, %v315
  %v317 = vrot.slane %v316, 1
  %v318 = vmax.f32 %v316, %v317
  %v319 = vld [vmem:[%s269 + $0xb] sm:$0x1f]
  %v320 = vld [vmem:[%s269 + $0x1b] sm:$0x1f]
  %v321 = vld [vmem:[%s269 + $0x2b] sm:$0x1f]
  %v322 = vld [vmem:[%s269 + $0x3b] sm:$0x1f]
  %v323 = vld [vmem:[%s269 + $0x4b] sm:$0x1f]
  %v324 = vld [vmem:[%s269 + $0x5b] sm:$0x1f]
  %v325 = vsel %vm206, %v319, -inf
  %v326 = vsel %vm206, %v320, -inf
  %v327 = vsel %vm206, %v321, -inf
  %v328 = vsel %vm206, %v322, -inf
  %v329 = vsel %vm206, %v323, -inf
  %v330 = vmax.f32 %v325, %v329
  %v331 = vsel %vm206, %v324, -inf
  %v332 = vmax.f32 %v326, %v331
  %v333 = vmax.f32 %v330, %v332
  %v334 = vmax.f32 %v327, %v328
  %v335 = vmax.f32 %v333, %v334
  %v336 = vsel %vm206, %v335, -inf
  %v337 = vrot.slane %v336, 4
  %v338 = vmax.f32 %v336, %v337
  %v339 = vrot.slane %v338, 2
  %v340 = vmax.f32 %v338, %v339
  %v341 = vrot.slane %v340, 1
  %v342 = vmax.f32 %v340, %v341
  %v343 = vmax.f32 %v342, 0.0
  %s344 = scalar_lea.vmem %s0, 176
  %v345 = vld [vmem:[%s344] sm:$0x1f]
  %v346 = vld [vmem:[%s344 + $0x10] sm:$0x1f]
  %v347 = vld [vmem:[%s344 + $0x20] sm:$0x1f]
  %v348 = vld [vmem:[%s344 + $0x30] sm:$0x1f]
  %v349 = vld [vmem:[%s344 + $0x40] sm:$0x1f]
  %v350 = vsel %vm206, %v345, -inf
  %v351 = vsel %vm206, %v346, -inf
  %v352 = vsel %vm206, %v347, -inf
  %v353 = vsel %vm206, %v348, -inf
  %v354 = vsel %vm206, %v349, -inf
  %v355 = vmax.f32 %v350, %v354
  %v356 = vmax.f32 %v355, %v351
  %v357 = vmax.f32 %v352, %v353
  %v358 = vmax.f32 %v356, %v357
  %v359 = vsel %vm206, %v358, -inf
  %v360 = vrot.slane %v359, 4
  %v361 = vmax.f32 %v359, %v360
  %v362 = vrot.slane %v361, 2
  %v363 = vmax.f32 %v361, %v362
  %v364 = vrot.slane %v363, 1
  %v365 = vmax.f32 %v363, %v364
  %v366 = vmax.f32 %v365, 0.0
  %v367 = vld [vmem:[%s344 + $0x5] sm:$0x3f]
  %v368 = vld [vmem:[%s344 + $0x15] sm:$0x3f]
  %v369 = vld [vmem:[%s344 + $0x25] sm:$0x3f]
  %v370 = vld [vmem:[%s344 + $0x35] sm:$0x3f]
  %v371 = vld [vmem:[%s344 + $0x45] sm:$0x3f]
  %v372 = vsel %vm229, %v367, -inf
  %v373 = vsel %vm229, %v368, -inf
  %v374 = vsel %vm229, %v369, -inf
  %v375 = vsel %vm229, %v370, -inf
  %v376 = vsel %vm229, %v371, -inf
  %v377 = vmax.f32 %v372, %v376
  %v378 = vmax.f32 %v377, %v373
  %v379 = vmax.f32 %v374, %v375
  %v380 = vmax.f32 %v378, %v379
  %v381 = vsel %vm229, %v380, -inf
  %v382 = vrot.slane %v381, 4
  %v383 = vmax.f32 %v381, %v382
  %v384 = vrot.slane %v383, 2
  %v385 = vmax.f32 %v383, %v384
  %v386 = vrot.slane %v385, 1
  %v387 = vmax.f32 %v385, %v386
  %v388 = vmax.f32 %v387, 0.0
  %v389 = vld [vmem:[%s344 + $0xb] sm:$0x1f]
  %v390 = vld [vmem:[%s344 + $0x1b] sm:$0x1f]
  %v391 = vld [vmem:[%s344 + $0x2b] sm:$0x1f]
  %v392 = vld [vmem:[%s344 + $0x3b] sm:$0x1f]
  %v393 = vld [vmem:[%s344 + $0x4b] sm:$0x1f]
  %v394 = vsel %vm206, %v389, -inf
  %v395 = vsel %vm206, %v390, -inf
  %v396 = vsel %vm206, %v391, -inf
  %v397 = vsel %vm206, %v392, -inf
  %v398 = vsel %vm206, %v393, -inf
  %v399 = vmax.f32 %v394, %v398
  %v400 = vmax.f32 %v399, %v395
  %v401 = vmax.f32 %v396, %v397
  %v402 = vmax.f32 %v400, %v401
  %v403 = vsel %vm206, %v402, -inf
  %v404 = vrot.slane %v403, 4
  %v405 = vmax.f32 %v403, %v404
  %v406 = vrot.slane %v405, 2
  %v407 = vmax.f32 %v405, %v406
  %v408 = vrot.slane %v407, 1
  %v409 = vmax.f32 %v407, %v408
  %v410 = vmax.f32 %v409, 0.0
  %vm411 = vcmask 1040384
  %v412 = vsel %vm411, %v111, %v125
  %vm413 = vcmask 1041408
  %v414 = vsel %vm413, %v412, %v139
  %vm415 = vcmask 1042432
  %v416 = vsel %vm415, %v414, %v170
  %vm417 = vcmask 1043456
  %v418 = vsel %vm417, %v416, %v200
  %vm419 = vcmask 1044480
  %v420 = vsel %vm419, %v418, %v223
  %vm421 = vcmask 1045504
  %v422 = vsel %vm421, %v420, %v246
  %vm423 = vcmask 1046528
  %v424 = vsel %vm423, %v422, %v268
  %v425 = vsel %vm411, %v294, %v318
  %v426 = vsel %vm413, %v425, %v343
  %v427 = vsel %vm415, %v426, %v366
  %v428 = vsel %vm417, %v427, %v388
  %v429 = vsel %vm419, %v428, %v410
  %430 = vst.msk [vmem:[%s1] sm:$0xff] %vm40, %v424
  %431 = vst.msk [vmem:[%s1 + $0x8] sm:$0x3f] %vm229, %v429
  // Predicated region
  $region6: #{tpu_custom_call.1} parent=0 // pred_check
    _
  $region7: #{tpu_custom_call.1} parent=0 // pred_check_branch
    %433 = sbr.rel (0) target = $region9
  $region8: #{tpu_custom_call.1} parent=0 // pred_region
    _
  $region9: #{tpu_custom_call.1} parent=0 // pred_fallthru
    _
  // Predicated region
  $region10: #{tpu_custom_call.1} parent=0 // pred_check
    _
  $region11: #{tpu_custom_call.1} parent=0 // pred_check_branch
    %435 = sbr.rel (0) target = $region13
  $region12: #{tpu_custom_call.1} parent=0 // pred_region
    _
  $region13: #{tpu_custom_call.1} parent=0 // pred_fallthru
    _

</llo_original>
